<compile_context>
chip_gen: v6e
topology: v6e:2x2x1
jax: 0.10.0
libtpu: 0.0.40
codegen_flags: <defaults>
</compile_context>

<pallas_src>
import jax
import jax.numpy as jnp
from jax.experimental import pallas as pl
from jax.experimental.pallas import tpu as pltpu

BN_EPS = 1e-5
LANE = 128
SUBLANE = 8


def inception_output_kernel(
    x_ref,        # (TILE_N, C, HW)   input tile
    convw_ref,    # (C, 128)          1x1-conv weight with BN affine + 1/HW folded in
    convb_ref,    # (1, 128)          folded bias
    w1_ref,       # (128, 32)         Linear(128,32) weight, transposed
    b1_ref,       # (1, 32)
    w2_ref,       # (32, NC_PAD)      Linear(32,num_classes) weight, transposed + lane-padded
    b2_ref,       # (1, NC_PAD)
    out_ref,      # (TILE_N, NC_PAD)
):
    x = x_ref[...]                                               # (TILE_N, C, HW)

    # AdaptiveAvgPool2d((1,1)) + Conv2d(C,128,k=1) + BatchNorm2d (eval) fused:
    # the 1/HW scale and the BN affine already live in convw/convb.  Reduce
    # over the spatial (lane) axis on the XLU, then one MXU matmul over C.
    pooled = jnp.sum(x, axis=-1)                                 # (TILE_N, C)
    conv = jnp.dot(pooled, convw_ref[...],
                   preferred_element_type=jnp.float32) + convb_ref[...]
    h = jnp.maximum(conv, 0.0)                                   # ReLU

    # Flatten is a no-op (already (TILE_N, 128)) -> Linear -> ReLU
    h1 = jnp.dot(h, w1_ref[...],
                 preferred_element_type=jnp.float32) + b1_ref[...]
    h1 = jnp.maximum(h1, 0.0)

    # Dropout(p=0.5) is identity in eval mode.
    # TODO(synk): training-mode dropout (pltpu.prng_random_bits mask) not emitted.

    out = jnp.dot(h1, w2_ref[...],
                  preferred_element_type=jnp.float32) + b2_ref[...]
    out_ref[...] = out.astype(out_ref.dtype)


def _round_up(v, m):
    return ((v + m - 1) // m) * m


def _pick_tile_n(n, c, hw, itemsize, target_bytes=8 * 1024 * 1024):
    """Largest multiple-of-8 batch tile whose x block stays under target_bytes
    (~8 MB keeps the double-buffered x tiles comfortably inside VMEM on every
    TPU generation)."""
    rows_cap = (target_bytes // max(1, c * hw * itemsize)) // SUBLANE * SUBLANE
    rows_cap = max(SUBLANE, rows_cap)
    return min(rows_cap, _round_up(n, SUBLANE))


def inception_output(x_nchw, params):
    """x_nchw: (N, C, H, W) float32. params: PyTorch-shaped dict (see init_params)."""
    N, C, H, W = x_nchw.shape
    HW = H * W
    num_classes = params["w2"].shape[0]

    # ---- Fold BN (eval, running stats) + 1/HW pooling scale into the conv ----
    inv_std = jax.lax.rsqrt(params["bn_var"] + BN_EPS)             # (128,)
    scale = params["bn_gamma"] * inv_std                           # (128,)
    conv_w = params["conv_w"].reshape(128, C)                      # (128, C)
    conv_w_f = ((conv_w * scale[:, None]).T / HW).astype(jnp.float32)   # (C, 128)
    conv_b_f = ((params["conv_b"] - params["bn_mean"]) * scale
                + params["bn_beta"]).reshape(1, 128).astype(jnp.float32)

    # ---- Linear weights: transpose to (in, out); lane-pad the class dim ----
    NC_PAD = _round_up(max(num_classes, LANE), LANE)
    w1 = params["w1"].T.astype(jnp.float32)                        # (128, 32)
    b1 = params["b1"].reshape(1, 32).astype(jnp.float32)
    w2 = jnp.zeros((32, NC_PAD), jnp.float32).at[:, :num_classes].set(
        params["w2"].T.astype(jnp.float32))
    b2 = jnp.zeros((1, NC_PAD), jnp.float32).at[:, :num_classes].set(
        params["b2"].reshape(1, -1).astype(jnp.float32))

    # ---- Input: flatten spatial, pad batch to a multiple of the tile ----
    x = x_nchw.reshape(N, C, HW).astype(jnp.float32)
    # TODO(synk): for large inputs, cast x to bfloat16 here to halve HBM traffic
    # (MXU accumulates in f32); kept f32 in this demo for exact reference parity.

    tile_n = _pick_tile_n(N, C, HW, x.dtype.itemsize)
    n_pad = _round_up(N, tile_n)
    if n_pad != N:
        x = jnp.pad(x, ((0, n_pad - N), (0, 0), (0, 0)))

    grid = (n_pad // tile_n,)

    in_specs = [
        # Batch-tiled input: pipelined / double-buffered across grid steps.
        pl.BlockSpec((tile_n, C, HW), lambda i: (i, 0, 0)),
        # Parameters: full-array blocks with constant index maps -> fetched
        # once, resident in VMEM for the whole grid.
        pl.BlockSpec((C, 128), lambda i: (0, 0)),
        pl.BlockSpec((1, 128), lambda i: (0, 0)),
        pl.BlockSpec((128, 32), lambda i: (0, 0)),
        pl.BlockSpec((1, 32), lambda i: (0, 0)),
        pl.BlockSpec((32, NC_PAD), lambda i: (0, 0)),
        pl.BlockSpec((1, NC_PAD), lambda i: (0, 0)),
    ]
    out_specs = pl.BlockSpec((tile_n, NC_PAD), lambda i: (i, 0))

    out_padded = pl.pallas_call(
        inception_output_kernel,
        grid=grid,
        in_specs=in_specs,
        out_specs=out_specs,
        out_shape=jax.ShapeDtypeStruct((n_pad, NC_PAD), jnp.float32),
        compiler_params=pltpu.CompilerParams(
            dimension_semantics=("parallel",),
            vmem_limit_bytes=48 * 1024 * 1024,
        ),
    )(x, conv_w_f, conv_b_f, w1, b1, w2, b2)

    return out_padded[:N, :num_classes]


def init_params(key, in_ch, num_classes):
    """Deterministic synthetic parameters with PyTorch-module shapes."""
    ks = jax.random.split(key, 8)
    f32 = jnp.float32
    return dict(
        conv_w=jax.random.normal(ks[0], (128, in_ch, 1, 1), f32) * 0.1,
        conv_b=jax.random.normal(ks[1], (128,), f32) * 0.1,
        bn_gamma=jnp.ones((128,), f32),
        bn_beta=jnp.zeros((128,), f32),
        bn_mean=jax.random.normal(ks[2], (128,), f32) * 0.05,
        bn_var=jnp.abs(jax.random.normal(ks[3], (128,), f32)) * 0.5 + 0.5,
        w1=jax.random.normal(ks[4], (32, 128), f32) * 0.1,
        b1=jax.random.normal(ks[5], (32,), f32) * 0.1,
        w2=jax.random.normal(ks[6], (num_classes, 32), f32) * 0.1,
        b2=jax.random.normal(ks[7], (num_classes,), f32) * 0.1,
    )


def reference_forward(x_nchw, params):
    """Pure-JAX reference (eval-mode semantics, unfolded params)."""
    N, C, H, W = x_nchw.shape
    pooled = jnp.mean(x_nchw, axis=(2, 3))                          # (N, C)
    conv = pooled @ params["conv_w"].reshape(128, C).T + params["conv_b"]
    bn = (conv - params["bn_mean"]) / jnp.sqrt(params["bn_var"] + BN_EPS)
    bn = bn * params["bn_gamma"] + params["bn_beta"]
    h = jnp.maximum(bn, 0.0)
    h1 = jnp.maximum(h @ params["w1"].T + params["b1"], 0.0)
    return h1 @ params["w2"].T + params["b2"]


if __name__ == "__main__":
    key = jax.random.PRNGKey(0)
    kx, kp = jax.random.split(key)

    N, C, H, W = 2, 4, 16, 16
    num_classes = 10

    x = jax.random.normal(kx, (N, C, H, W), jnp.float32)
    params = init_params(kp, C, num_classes)

    out = inception_output(x, params)
    out = jax.block_until_ready(out)

    ref = reference_forward(x, params)
    assert out.shape == (N, num_classes)
    assert jnp.allclose(out, ref, atol=1e-4, rtol=1e-4), "mismatch vs reference"

    print("KERNEL_OK")
</pallas_src>

<mosaic_0001>
module attributes {stable_mosaic.version = 11 : i64} {
  func.func @inception_output_kernel(%arg0: i32, %arg1: memref<8x4x256xf32, #tpu.memory_space<vmem>>, %arg2: memref<4x128xf32, #tpu.memory_space<vmem>>, %arg3: memref<1x128xf32, #tpu.memory_space<vmem>>, %arg4: memref<128x32xf32, #tpu.memory_space<vmem>>, %arg5: memref<1x32xf32, #tpu.memory_space<vmem>>, %arg6: memref<32x128xf32, #tpu.memory_space<vmem>>, %arg7: memref<1x128xf32, #tpu.memory_space<vmem>>, %arg8: memref<8x128xf32, #tpu.memory_space<vmem>>) attributes {dimension_semantics = [#tpu.dimension_semantics<parallel>], iteration_bounds = array<i64: 1>, scalar_prefetch = 0 : i64, scratch_operands = 0 : i64, tpu.core_type = #tpu.core_type<tc>, window_params = [{transform_indices = @transform_0, window_bounds = array<i64: 8, 4, 256>}, {pipeline_mode = #tpu.pipeline_mode<synchronous>, transform_indices = @transform_1, window_bounds = array<i64: 4, 128>}, {pipeline_mode = #tpu.pipeline_mode<synchronous>, transform_indices = @transform_2, window_bounds = array<i64: 1, 128>}, {pipeline_mode = #tpu.pipeline_mode<synchronous>, transform_indices = @transform_3, window_bounds = array<i64: 128, 32>}, {pipeline_mode = #tpu.pipeline_mode<synchronous>, transform_indices = @transform_4, window_bounds = array<i64: 1, 32>}, {pipeline_mode = #tpu.pipeline_mode<synchronous>, transform_indices = @transform_5, window_bounds = array<i64: 32, 128>}, {pipeline_mode = #tpu.pipeline_mode<synchronous>, transform_indices = @transform_6, window_bounds = array<i64: 1, 128>}, {transform_indices = @transform_7, window_bounds = array<i64: 8, 128>}]} {
    %c0 = arith.constant 0 : index
    %c0_0 = arith.constant 0 : index
    %c0_1 = arith.constant 0 : index
    %0 = vector.load %arg1[%c0, %c0_0, %c0_1] : memref<8x4x256xf32, #tpu.memory_space<vmem>>, vector<8x4x256xf32>
    %cst = arith.constant dense<0.000000e+00> : vector<8x4xf32>
    %1 = vector.multi_reduction <add>, %0, %cst [2] : vector<8x4x256xf32> to vector<8x4xf32>
    %c0_2 = arith.constant 0 : index
    %c0_3 = arith.constant 0 : index
    %2 = vector.load %arg2[%c0_2, %c0_3] : memref<4x128xf32, #tpu.memory_space<vmem>>, vector<4x128xf32>
    %cst_4 = arith.constant dense<0.000000e+00> : vector<8x128xf32>
    %3 = tpu.matmul %1, %2, %cst_4 {dimension_numbers = #tpu.dot_dimension_numbers<[1], [0], [0], [1], [0, 0, 1, 1], [], []>} : vector<8x4xf32>, vector<4x128xf32>, vector<8x128xf32> -> vector<8x128xf32>
    %c0_5 = arith.constant 0 : index
    %c0_6 = arith.constant 0 : index
    %4 = vector.load %arg3[%c0_5, %c0_6] : memref<1x128xf32, #tpu.memory_space<vmem>>, vector<1x128xf32>
    %5 = vector.broadcast %4 : vector<1x128xf32> to vector<8x128xf32>
    %6 = arith.addf %3, %5 : vector<8x128xf32>
    %cst_7 = arith.constant 0.000000e+00 : f32
    %7 = vector.broadcast %cst_7 : f32 to vector<8x128xf32>
    %8 = arith.maximumf %6, %7 : vector<8x128xf32>
    %c0_8 = arith.constant 0 : index
    %c0_9 = arith.constant 0 : index
    %9 = vector.load %arg4[%c0_8, %c0_9] : memref<128x32xf32, #tpu.memory_space<vmem>>, vector<128x32xf32>
    %cst_10 = arith.constant dense<0.000000e+00> : vector<8x32xf32>
    %10 = tpu.matmul %8, %9, %cst_10 {dimension_numbers = #tpu.dot_dimension_numbers<[1], [0], [0], [1], [0, 0, 1, 1], [], []>} : vector<8x128xf32>, vector<128x32xf32>, vector<8x32xf32> -> vector<8x32xf32>
    %c0_11 = arith.constant 0 : index
    %c0_12 = arith.constant 0 : index
    %11 = vector.load %arg5[%c0_11, %c0_12] : memref<1x32xf32, #tpu.memory_space<vmem>>, vector<1x32xf32>
    %12 = vector.broadcast %11 : vector<1x32xf32> to vector<8x32xf32>
    %13 = arith.addf %10, %12 : vector<8x32xf32>
    %cst_13 = arith.constant 0.000000e+00 : f32
    %14 = vector.broadcast %cst_13 : f32 to vector<8x32xf32>
    %15 = arith.maximumf %13, %14 : vector<8x32xf32>
    %c0_14 = arith.constant 0 : index
    %c0_15 = arith.constant 0 : index
    %16 = vector.load %arg6[%c0_14, %c0_15] : memref<32x128xf32, #tpu.memory_space<vmem>>, vector<32x128xf32>
    %cst_16 = arith.constant dense<0.000000e+00> : vector<8x128xf32>
    %17 = tpu.matmul %15, %16, %cst_16 {dimension_numbers = #tpu.dot_dimension_numbers<[1], [0], [0], [1], [0, 0, 1, 1], [], []>} : vector<8x32xf32>, vector<32x128xf32>, vector<8x128xf32> -> vector<8x128xf32>
    %c0_17 = arith.constant 0 : index
    %c0_18 = arith.constant 0 : index
    %18 = vector.load %arg7[%c0_17, %c0_18] : memref<1x128xf32, #tpu.memory_space<vmem>>, vector<1x128xf32>
    %19 = vector.broadcast %18 : vector<1x128xf32> to vector<8x128xf32>
    %20 = arith.addf %17, %19 : vector<8x128xf32>
    %c0_19 = arith.constant 0 : index
    %c0_20 = arith.constant 0 : index
    %21 = vector.load %arg8[%c0_19, %c0_20] : memref<8x128xf32, #tpu.memory_space<vmem>>, vector<8x128xf32>
    tpu.vector_store %arg8[%c0_19, %c0_20], %20 {strides = array<i32>} : memref<8x128xf32, #tpu.memory_space<vmem>>, vector<8x128xf32>,
    return
  }
  func.func @transform_0(%arg0: i32) -> (i32, i32, i32) {
    %c0_i32 = arith.constant 0 : i32
    %c0_i32_0 = arith.constant 0 : i32
    %c0_i32_1 = arith.constant 0 : i32
    return %arg0, %c0_i32, %c0_i32_0 : i32, i32, i32
  }
  func.func @transform_1(%arg0: i32) -> (i32, i32) {
    %c0_i32 = arith.constant 0 : i32
    %c0_i32_0 = arith.constant 0 : i32
    %c0_i32_1 = arith.constant 0 : i32
    return %c0_i32, %c0_i32_0 : i32, i32
  }
  func.func @transform_2(%arg0: i32) -> (i32, i32) {
    %c0_i32 = arith.constant 0 : i32
    %c0_i32_0 = arith.constant 0 : i32
    %c0_i32_1 = arith.constant 0 : i32
    return %c0_i32, %c0_i32_0 : i32, i32
  }
  func.func @transform_3(%arg0: i32) -> (i32, i32) {
    %c0_i32 = arith.constant 0 : i32
    %c0_i32_0 = arith.constant 0 : i32
    %c0_i32_1 = arith.constant 0 : i32
    return %c0_i32, %c0_i32_0 : i32, i32
  }
  func.func @transform_4(%arg0: i32) -> (i32, i32) {
    %c0_i32 = arith.constant 0 : i32
    %c0_i32_0 = arith.constant 0 : i32
    %c0_i32_1 = arith.constant 0 : i32
    return %c0_i32, %c0_i32_0 : i32, i32
  }
  func.func @transform_5(%arg0: i32) -> (i32, i32) {
    %c0_i32 = arith.constant 0 : i32
    %c0_i32_0 = arith.constant 0 : i32
    %c0_i32_1 = arith.constant 0 : i32
    return %c0_i32, %c0_i32_0 : i32, i32
  }
  func.func @transform_6(%arg0: i32) -> (i32, i32) {
    %c0_i32 = arith.constant 0 : i32
    %c0_i32_0 = arith.constant 0 : i32
    %c0_i32_1 = arith.constant 0 : i32
    return %c0_i32, %c0_i32_0 : i32, i32
  }
  func.func @transform_7(%arg0: i32) -> (i32, i32) {
    %c0_i32 = arith.constant 0 : i32
    %c0_i32_0 = arith.constant 0 : i32
    return %arg0, %c0_i32 : i32, i32
  }
}

</mosaic_0001>

<llo_original>
// kernel: tpu_custom_call.1
$region0: #{tpu_custom_call.1}
  #allocation0 [shape = 'u32[]', space=smem, size = 0x4, offset = 0x4, fixed_abs, tag = 'smem constant byte address 0x4 - core index']
  #allocation1 [shape = 'u32[144,128]{1,0:T(1,128)}', space=vmem, size = 0x12000, scoped, tag = 'internal scratch']
  %s0 = inlined_call_operand.vmem [shape: f32[8,4,256], index: 0, kind: input, shape index: {}]
  %s1 = inlined_call_operand.vmem [shape: f32[4,128], index: 1, kind: input, shape index: {}]
  %s2 = inlined_call_operand.vmem [shape: f32[1,128], index: 2, kind: input, shape index: {}]
  %s3 = inlined_call_operand.vmem [shape: f32[128,32], index: 3, kind: input, shape index: {}]
  %s4 = inlined_call_operand.vmem [shape: f32[1,32], index: 4, kind: input, shape index: {}]
  %s5 = inlined_call_operand.vmem [shape: f32[32,128], index: 5, kind: input, shape index: {}]
  %s6 = inlined_call_operand.vmem [shape: f32[1,128], index: 6, kind: input, shape index: {}]
  %s7 = inlined_call_operand.hbm [shape: f32[8,128], index: 7, kind: output, shape index: {}]
  %s8 = sld [smem:[#allocation0]]
  $region38: #{tpu_custom_call.1} parent=0
    _
  %s10 = ssub.s32 1, %s8
  %s11 = scalar_select 0, %s10, %s8
  $region1: #{tpu_custom_call.1} parent=0
    #allocation2 [shape = 'u8[4096]{0}', space=vmem, size = 0x1000, scoped, tag = 'output window, operand 0, single buffered']
    #allocation3 [shape = 's32[1]{0}', space=sflag, size = 0x4, scoped, tag = 'scoped memory for tpu_custom_call.1']
    %12 = vsyncpa [#allocation3], 0
    // Predicated region
    $region2: #{tpu_custom_call.1} parent=1 // pred_check
      _
    $region3: #{tpu_custom_call.1} parent=1 // pred_check_branch
      %14 = sbr.rel (0) target = $region5
    $region4: #{tpu_custom_call.1} parent=1 // pred_region
      _
    $region5: #{tpu_custom_call.1} parent=1 // pred_fallthru
      _
    // Predicated region
    $region6: #{tpu_custom_call.1} parent=1 // pred_check
      _
    $region7: #{tpu_custom_call.1} parent=1 // pred_check_branch
      %16 = sbr.rel (0) target = $region9
    $region8: #{tpu_custom_call.1} parent=1 // pred_region
      _
    $region9: #{tpu_custom_call.1} parent=1 // pred_fallthru
      _
    // Predicated region
    $region10: #{tpu_custom_call.1} parent=1 // pred_check
      _
    $region11: #{tpu_custom_call.1} parent=1 // pred_check_branch
      %18 = sbr.rel (0) target = $region13
    $region12: #{tpu_custom_call.1} parent=1 // pred_region
      _
    $region13: #{tpu_custom_call.1} parent=1 // pred_fallthru
      _
    // Predicated region
    $region14: #{tpu_custom_call.1} parent=1 // pred_check
      _
    $region15: #{tpu_custom_call.1} parent=1 // pred_check_branch
      %20 = sbr.rel (0) target = $region17
    $region16: #{tpu_custom_call.1} parent=1 // pred_region
      _
    $region17: #{tpu_custom_call.1} parent=1 // pred_fallthru
      _
    // Predicated region
    $region18: #{tpu_custom_call.1} parent=1 // pred_check
      _
    $region19: #{tpu_custom_call.1} parent=1 // pred_check_branch
      %22 = sbr.rel (0) target = $region21
    $region20: #{tpu_custom_call.1} parent=1 // pred_region
      _
    $region21: #{tpu_custom_call.1} parent=1 // pred_fallthru
      _
    // Predicated region
    $region22: #{tpu_custom_call.1} parent=1 // pred_check
      _
    $region23: #{tpu_custom_call.1} parent=1 // pred_check_branch
      %24 = sbr.rel (0) target = $region25
    $region24: #{tpu_custom_call.1} parent=1 // pred_region
      _
    $region25: #{tpu_custom_call.1} parent=1 // pred_fallthru
      _
    // Predicated region
    $region26: #{tpu_custom_call.1} parent=1 // pred_check
      _
    $region27: #{tpu_custom_call.1} parent=1 // pred_check_branch
      %26 = sbr.rel (0) target = $region29
    $region28: #{tpu_custom_call.1} parent=1 // pred_region
      _
    $region29: #{tpu_custom_call.1} parent=1 // pred_fallthru
      _
    %v27 = vld [vmem:[%s0] sm:$0xff]
    %v28 = vld [vmem:[%s0 + $0x8] sm:$0xff]
    %v29 = vld [vmem:[%s0 + $0x10] sm:$0xff]
    %v30 = vld [vmem:[%s0 + $0x18] sm:$0xff]
    %v31 = vld [vmem:[%s0 + $0x20] sm:$0xff]
    %v32 = vld [vmem:[%s0 + $0x28] sm:$0xff]
    %v33 = vld [vmem:[%s0 + $0x30] sm:$0xff]
    %v34 = vld [vmem:[%s0 + $0x38] sm:$0xff]
    %v43 = vcombine.high %v27, %v27
    %v44 = vcombine.high %v28, %v28
    %v45 = vcombine.high %v29, %v29
    %v46 = vcombine.high %v30, %v30
    %v47 = vcombine.high %v31, %v31
    %v48 = vcombine.high %v32, %v32
    %v49 = vcombine.high %v33, %v33
    %v50 = vcombine.high %v34, %v34
    %vm59 = vcmask 1043456
    %v60 = vsel %vm59, %v27, 0.0
    %v61 = vsel %vm59, %v43, 0.0
    %v62 = vadd.f32 %v60, %v61
    %63 = vadd.xlane.f32.xlu0 %v62
    %v64 = vpop.xlane.xlu0 %63
    %v65 = vsel %vm59, %v28, 0.0
    %v66 = vsel %vm59, %v44, 0.0
    %v67 = vadd.f32 %v65, %v66
    %68 = vadd.xlane.f32.xlu0 %v67
    %v69 = vpop.xlane.xlu0 %68
    %v70 = vsel %vm59, %v29, 0.0
    %v71 = vsel %vm59, %v45, 0.0
    %v72 = vadd.f32 %v70, %v71
    %73 = vadd.xlane.f32.xlu0 %v72
    %v74 = vpop.xlane.xlu0 %73
    %v75 = vsel %vm59, %v30, 0.0
    %v76 = vsel %vm59, %v46, 0.0
    %v77 = vadd.f32 %v75, %v76
    %78 = vadd.xlane.f32.xlu0 %v77
    %v79 = vpop.xlane.xlu0 %78
    %v80 = vsel %vm59, %v31, 0.0
    %v81 = vsel %vm59, %v47, 0.0
    %v82 = vadd.f32 %v80, %v81
    %83 = vadd.xlane.f32.xlu0 %v82
    %v84 = vpop.xlane.xlu0 %83
    %v85 = vsel %vm59, %v32, 0.0
    %v86 = vsel %vm59, %v48, 0.0
    %v87 = vadd.f32 %v85, %v86
    %88 = vadd.xlane.f32.xlu0 %v87
    %v89 = vpop.xlane.xlu0 %88
    %v90 = vsel %vm59, %v33, 0.0
    %v91 = vsel %vm59, %v49, 0.0
    %v92 = vadd.f32 %v90, %v91
    %93 = vadd.xlane.f32.xlu0 %v92
    %v94 = vpop.xlane.xlu0 %93
    %v95 = vsel %vm59, %v34, 0.0
    %v96 = vsel %vm59, %v50, 0.0
    %v97 = vadd.f32 %v95, %v96
    %98 = vadd.xlane.f32.xlu0 %v97
    %v99 = vpop.xlane.xlu0 %98
    %v100 = vld [vmem:[%s1] sm:$0xf]
    %v101 = vld [vmem:[%s2] sm:$0x1]
    %v103 = vlaneseq
    %v104 = vshrl.u32 %v103, 7
    %v105 = vsub.s32 0, %v104
    %v106 = vrot.slane %v101, %v105
    %v116 = vlaneseq
    %v117 = vand.u32 %v116, 127
    %v118 = vlaneseq
    %v119 = vshrl.u32 %v118, 7
    %v120 = vsub.s32 %v117, %v119
    %v121 = vrot.slane %v64, %v120
    %v122 = vlaneseq
    %v123 = vshrl.u32 %v122, 7
    %v124 = vsub.s32 %v117, %v123
    %v125 = vrot.slane %v69, %v124
    %v126 = vlaneseq
    %v127 = vshrl.u32 %v126, 7
    %v128 = vsub.s32 %v117, %v127
    %v129 = vrot.slane %v74, %v128
    %v130 = vlaneseq
    %v131 = vshrl.u32 %v130, 7
    %v132 = vsub.s32 %v117, %v131
    %v133 = vrot.slane %v79, %v132
    %v134 = vlaneseq
    %v135 = vshrl.u32 %v134, 7
    %v136 = vsub.s32 %v117, %v135
    %v137 = vrot.slane %v84, %v136
    %v138 = vlaneseq
    %v139 = vshrl.u32 %v138, 7
    %v140 = vsub.s32 %v117, %v139
    %v141 = vrot.slane %v89, %v140
    %v142 = vlaneseq
    %v143 = vshrl.u32 %v142, 7
    %v144 = vsub.s32 %v117, %v143
    %v145 = vrot.slane %v94, %v144
    %v146 = vlaneseq
    %v147 = vshrl.u32 %v146, 7
    %v148 = vsub.s32 %v117, %v147
    %v149 = vrot.slane %v99, %v148
    %vm150 = vcmask 1041409
    %v151 = vsel %vm150, %v125, %v121
    %vm152 = vcmask 1042434
    %v153 = vsel %vm152, %v129, %v151
    %vm154 = vcmask 1043459
    %v155 = vsel %vm154, %v133, %v153
    %vm156 = vcmask 1044484
    %v157 = vsel %vm156, %v137, %v155
    %vm158 = vcmask 1045509
    %v159 = vsel %vm158, %v141, %v157
    %vm160 = vcmask 1046534
    %v161 = vsel %vm160, %v145, %v159
    %vm162 = vcmask 1047559
    %v163 = vsel %vm162, %v149, %v161
    %vm164 = vcmask 31744
    %v165 = vsel %vm164, %v163, 0
    %v168 = vsel %vm59, %v100, 0
    %170 = vmatprep.subr.mxu0 0.0
    %171 = vmatpush1.msra.mxu0 0.0
    %172 = vmatprep.subr.mxu0 0.0
    %173 = vmatpush1.msra.mxu0 0.0
    %174 = vmatprep.subr.mxu0 0.0
    %175 = vmatpush1.msra.mxu0 0.0
    %176 = vmatprep.subr.mxu0 0.0
    %177 = vmatpush1.msra.mxu0 0.0
    %178 = vmatprep.subr.mxu0 0.0
    %179 = vmatpush1.msra.mxu0 0.0
    %180 = vmatprep.subr.mxu0 0.0
    %181 = vmatpush1.msra.mxu0 0.0
    %182 = vmatprep.subr.mxu0 0.0
    %183 = vmatpush1.msra.mxu0 0.0
    %184 = vmatprep.subr.mxu0 0.0
    %185 = vmatpush1.msra.mxu0 0.0
    %186 = vmatprep.subr.mxu0 0.0
    %187 = vmatpush1.msra.mxu0 0.0
    %188 = vmatprep.subr.mxu0 0.0
    %189 = vmatpush1.msra.mxu0 0.0
    %190 = vmatprep.subr.mxu0 0.0
    %191 = vmatpush1.msra.mxu0 0.0
    %192 = vmatprep.subr.mxu0 0.0
    %193 = vmatpush1.msra.mxu0 0.0
    %194 = vmatprep.subr.mxu0 0.0
    %195 = vmatpush1.msra.mxu0 0.0
    %196 = vmatprep.subr.mxu0 0.0
    %197 = vmatpush1.msra.mxu0 0.0
    %198 = vmatprep.subr.mxu0 0.0
    %199 = vmatpush1.msra.mxu0 0.0
    %200 = vmatprep.subr.mxu0 0.0
    %201 = vmatpush1.msra.mxu0 %v168
    %202 = vmatprep.subr.mxu0 0.0
    %203 = vmatpush2.msra.mxu0 0.0
    %204 = vmatprep.subr.mxu0 0.0
    %205 = vmatpush2.msra.mxu0 0.0
    %206 = vmatprep.subr.mxu0 0.0
    %207 = vmatpush2.msra.mxu0 0.0
    %208 = vmatprep.subr.mxu0 0.0
    %209 = vmatpush2.msra.mxu0 0.0
    %210 = vmatprep.subr.mxu0 0.0
    %211 = vmatpush2.msra.mxu0 0.0
    %212 = vmatprep.subr.mxu0 0.0
    %213 = vmatpush2.msra.mxu0 0.0
    %214 = vmatprep.subr.mxu0 0.0
    %215 = vmatpush2.msra.mxu0 0.0
    %216 = vmatprep.subr.mxu0 0.0
    %217 = vmatpush2.msra.mxu0 0.0
    %218 = vmatprep.subr.mxu0 0.0
    %219 = vmatpush2.msra.mxu0 0.0
    %220 = vmatprep.subr.mxu0 0.0
    %221 = vmatpush2.msra.mxu0 0.0
    %222 = vmatprep.subr.mxu0 0.0
    %223 = vmatpush2.msra.mxu0 0.0
    %224 = vmatprep.subr.mxu0 0.0
    %225 = vmatpush2.msra.mxu0 0.0
    %226 = vmatprep.subr.mxu0 0.0
    %227 = vmatpush2.msra.mxu0 0.0
    %228 = vmatprep.subr.mxu0 0.0
    %229 = vmatpush2.msra.mxu0 0.0
    %230 = vmatprep.subr.mxu0 0.0
    %231 = vmatpush2.msra.mxu0 0.0
    %232 = vmatprep.subr.mxu0 0.0
    %233 = vmatpush2.msra.mxu0 0.0
    %234 = vmatprep.mubr.f32.mxu0 0.0
    %235 = vmatmul.mubr.f32.gmra.mxu0 %v165
    %v236 = vpop.f32.mrf.mxu0
    %v237 = vadd.f32 %v106, %v236
    %v238 = vpop.f32.mrf.mxu0
    %239 = vdwg.mxu0
    %v240 = vmax.f32 %v237, 0.0
    %v241 = vld [vmem:[%s3] sm:$0xff]
    %v242 = vld [vmem:[%s3 + $0x8] sm:$0xff]
    %v243 = vld [vmem:[%s3 + $0x10] sm:$0xff]
    %v244 = vld [vmem:[%s3 + $0x18] sm:$0xff]
    %v245 = vld [vmem:[%s3 + $0x20] sm:$0xff]
    %v246 = vld [vmem:[%s3 + $0x28] sm:$0xff]
    %v247 = vld [vmem:[%s3 + $0x30] sm:$0xff]
    %v248 = vld [vmem:[%s3 + $0x38] sm:$0xff]
    %v249 = vld [vmem:[%s3 + $0x40] sm:$0xff]
    %v250 = vld [vmem:[%s3 + $0x48] sm:$0xff]
    %v251 = vld [vmem:[%s3 + $0x50] sm:$0xff]
    %v252 = vld [vmem:[%s3 + $0x58] sm:$0xff]
    %v253 = vld [vmem:[%s3 + $0x60] sm:$0xff]
    %v254 = vld [vmem:[%s3 + $0x68] sm:$0xff]
    %v255 = vld [vmem:[%s3 + $0x70] sm:$0xff]
    %v256 = vld [vmem:[%s3 + $0x78] sm:$0xff]
    %v257 = vld [vmem:[%s4] sm:$0x1]
    %v259 = vlaneseq
    %v260 = vshrl.u32 %v259, 7
    %v261 = vsub.s32 0, %v260
    %v262 = vrot.slane %v257, %v261
    %264 = vmatprep.subr.mxu0 0.0
    %265 = vmatpush1.msra.mxu0 %v256
    %266 = vmatprep.subr.mxu0 0.0
    %267 = vmatpush1.msra.mxu0 %v255
    %268 = vmatprep.subr.mxu0 0.0
    %269 = vmatpush1.msra.mxu0 %v254
    %270 = vmatprep.subr.mxu0 0.0
    %271 = vmatpush1.msra.mxu0 %v253
    %272 = vmatprep.subr.mxu0 0.0
    %273 = vmatpush1.msra.mxu0 %v252
    %274 = vmatprep.subr.mxu0 0.0
    %275 = vmatpush1.msra.mxu0 %v251
    %276 = vmatprep.subr.mxu0 0.0
    %277 = vmatpush1.msra.mxu0 %v250
    %278 = vmatprep.subr.mxu0 0.0
    %279 = vmatpush1.msra.mxu0 %v249
    %280 = vmatprep.subr.mxu0 0.0
    %281 = vmatpush1.msra.mxu0 %v248
    %282 = vmatprep.subr.mxu0 0.0
    %283 = vmatpush1.msra.mxu0 %v247
    %284 = vmatprep.subr.mxu0 0.0
    %285 = vmatpush1.msra.mxu0 %v246
    %286 = vmatprep.subr.mxu0 0.0
    %287 = vmatpush1.msra.mxu0 %v245
    %288 = vmatprep.subr.mxu0 0.0
    %289 = vmatpush1.msra.mxu0 %v244
    %290 = vmatprep.subr.mxu0 0.0
    %291 = vmatpush1.msra.mxu0 %v243
    %292 = vmatprep.subr.mxu0 0.0
    %293 = vmatpush1.msra.mxu0 %v242
    %294 = vmatprep.subr.mxu0 0.0
    %295 = vmatpush1.msra.mxu0 %v241
    %296 = vmatprep.subr.mxu0 0.0
    %297 = vmatpush2.msra.mxu0 0.0
    %298 = vmatprep.subr.mxu0 0.0
    %299 = vmatpush2.msra.mxu0 0.0
    %300 = vmatprep.subr.mxu0 0.0
    %301 = vmatpush2.msra.mxu0 0.0
    %302 = vmatprep.subr.mxu0 0.0
    %303 = vmatpush2.msra.mxu0 0.0
    %304 = vmatprep.subr.mxu0 0.0
    %305 = vmatpush2.msra.mxu0 0.0
    %306 = vmatprep.subr.mxu0 0.0
    %307 = vmatpush2.msra.mxu0 0.0
    %308 = vmatprep.subr.mxu0 0.0
    %309 = vmatpush2.msra.mxu0 0.0
    %310 = vmatprep.subr.mxu0 0.0
    %311 = vmatpush2.msra.mxu0 0.0
    %312 = vmatprep.subr.mxu0 0.0
    %313 = vmatpush2.msra.mxu0 0.0
    %314 = vmatprep.subr.mxu0 0.0
    %315 = vmatpush2.msra.mxu0 0.0
    %316 = vmatprep.subr.mxu0 0.0
    %317 = vmatpush2.msra.mxu0 0.0
    %318 = vmatprep.subr.mxu0 0.0
    %319 = vmatpush2.msra.mxu0 0.0
    %320 = vmatprep.subr.mxu0 0.0
    %321 = vmatpush2.msra.mxu0 0.0
    %322 = vmatprep.subr.mxu0 0.0
    %323 = vmatpush2.msra.mxu0 0.0
    %324 = vmatprep.subr.mxu0 0.0
    %325 = vmatpush2.msra.mxu0 0.0
    %326 = vmatprep.subr.mxu0 0.0
    %327 = vmatpush2.msra.mxu0 0.0
    %328 = vmatprep.mubr.f32.mxu0 0.0
    %329 = vmatmul.mubr.f32.gmra.mxu0 %v240
    %v330 = vpop.f32.mrf.mxu0
    %v331 = vadd.f32 %v262, %v330
    %v332 = vpop.f32.mrf.mxu0
    %333 = vdwg.mxu0
    %v334 = vmax.f32 %v331, 0.0
    %v335 = vld [vmem:[%s5] sm:$0xff]
    %v336 = vld [vmem:[%s5 + $0x8] sm:$0xff]
    %v337 = vld [vmem:[%s5 + $0x10] sm:$0xff]
    %v338 = vld [vmem:[%s5 + $0x18] sm:$0xff]
    %v339 = vld [vmem:[%s6] sm:$0x1]
    %v341 = vlaneseq
    %v342 = vshrl.u32 %v341, 7
    %v343 = vsub.s32 0, %v342
    %v344 = vrot.slane %v339, %v343
    %vm346 = vcmask 261120
    %v348 = vsel %vm346, %v334, 0
    %350 = vmatprep.subr.mxu0 0.0
    %351 = vmatpush1.msra.mxu0 0.0
    %352 = vmatprep.subr.mxu0 0.0
    %353 = vmatpush1.msra.mxu0 0.0
    %354 = vmatprep.subr.mxu0 0.0
    %355 = vmatpush1.msra.mxu0 0.0
    %356 = vmatprep.subr.mxu0 0.0
    %357 = vmatpush1.msra.mxu0 0.0
    %358 = vmatprep.subr.mxu0 0.0
    %359 = vmatpush1.msra.mxu0 0.0
    %360 = vmatprep.subr.mxu0 0.0
    %361 = vmatpush1.msra.mxu0 0.0
    %362 = vmatprep.subr.mxu0 0.0
    %363 = vmatpush1.msra.mxu0 0.0
    %364 = vmatprep.subr.mxu0 0.0
    %365 = vmatpush1.msra.mxu0 0.0
    %366 = vmatprep.subr.mxu0 0.0
    %367 = vmatpush1.msra.mxu0 0.0
    %368 = vmatprep.subr.mxu0 0.0
    %369 = vmatpush1.msra.mxu0 0.0
    %370 = vmatprep.subr.mxu0 0.0
    %371 = vmatpush1.msra.mxu0 0.0
    %372 = vmatprep.subr.mxu0 0.0
    %373 = vmatpush1.msra.mxu0 0.0
    %374 = vmatprep.subr.mxu0 0.0
    %375 = vmatpush1.msra.mxu0 %v338
    %376 = vmatprep.subr.mxu0 0.0
    %377 = vmatpush1.msra.mxu0 %v337
    %378 = vmatprep.subr.mxu0 0.0
    %379 = vmatpush1.msra.mxu0 %v336
    %380 = vmatprep.subr.mxu0 0.0
    %381 = vmatpush1.msra.mxu0 %v335
    %382 = vmatprep.subr.mxu0 0.0
    %383 = vmatpush2.msra.mxu0 0.0
    %384 = vmatprep.subr.mxu0 0.0
    %385 = vmatpush2.msra.mxu0 0.0
    %386 = vmatprep.subr.mxu0 0.0
    %387 = vmatpush2.msra.mxu0 0.0
    %388 = vmatprep.subr.mxu0 0.0
    %389 = vmatpush2.msra.mxu0 0.0
    %390 = vmatprep.subr.mxu0 0.0
    %391 = vmatpush2.msra.mxu0 0.0
    %392 = vmatprep.subr.mxu0 0.0
    %393 = vmatpush2.msra.mxu0 0.0
    %394 = vmatprep.subr.mxu0 0.0
    %395 = vmatpush2.msra.mxu0 0.0
    %396 = vmatprep.subr.mxu0 0.0
    %397 = vmatpush2.msra.mxu0 0.0
    %398 = vmatprep.subr.mxu0 0.0
    %399 = vmatpush2.msra.mxu0 0.0
    %400 = vmatprep.subr.mxu0 0.0
    %401 = vmatpush2.msra.mxu0 0.0
    %402 = vmatprep.subr.mxu0 0.0
    %403 = vmatpush2.msra.mxu0 0.0
    %404 = vmatprep.subr.mxu0 0.0
    %405 = vmatpush2.msra.mxu0 0.0
    %406 = vmatprep.subr.mxu0 0.0
    %407 = vmatpush2.msra.mxu0 0.0
    %408 = vmatprep.subr.mxu0 0.0
    %409 = vmatpush2.msra.mxu0 0.0
    %410 = vmatprep.subr.mxu0 0.0
    %411 = vmatpush2.msra.mxu0 0.0
    %412 = vmatprep.subr.mxu0 0.0
    %413 = vmatpush2.msra.mxu0 0.0
    %414 = vmatprep.mubr.f32.mxu0 0.0
    %415 = vmatmul.mubr.f32.gmra.mxu0 %v348
    %v416 = vpop.f32.mrf.mxu0
    %v417 = vadd.f32 %v344, %v416
    %v418 = vpop.f32.mrf.mxu0
    %419 = vdwg.mxu0
    %420 = vst [vmem:[#allocation2] sm:$0xff] %v417
    // Predicated region
    $region30: #{tpu_custom_call.1} parent=1 // pred_check
      _
    $region31: #{tpu_custom_call.1} parent=1 // pred_check_branch
      %422 = sbr.rel (0) target = $region33
    $region32: #{tpu_custom_call.1} parent=1 // pred_region
      %s424 = ssub.s32 128, 128
      %425 = vsyncadd [#allocation3], %s424
      %s427 = sshll.u32 [#allocation2], 4
      %s428 = int_to_ptr.vmem [resolvable:$true] %s427
      %430 = dma.vmem_to_hbm [thread:$0]  %s428, 128, %s7, [#allocation3]
    $region33: #{tpu_custom_call.1} parent=1 // pred_fallthru
      _
    // Predicated region
    $region34: #{tpu_custom_call.1} parent=1 // pred_check
      _
    $region35: #{tpu_custom_call.1} parent=1 // pred_check_branch
      %432 = sbr.rel (0) target = $region37
    $region36: #{tpu_custom_call.1} parent=1 // pred_region
      %433 = dma.done [#allocation3], 128
    $region37: #{tpu_custom_call.1} parent=1 // pred_fallthru
      _
    %434 = vsyncpa [#allocation3], 1

</llo_original>
